<compile_context>
chip_gen: v7x
topology: tpu7x:2x2x1
jax: 0.10.0
libtpu: 0.0.40
codegen_flags: <defaults>
</compile_context>

<pallas_src>
import jax
import jax.numpy as jnp
from jax import lax
from jax.experimental import pallas as pl
from jax.experimental.pallas import tpu as pltpu

BN_EPS = 1e-5
LEAKY_SLOPE = 0.2


def gconv_kernel(x_ref, w_ref, gamma_ref, beta_ref, gmat_ref, gt_ref, o_ref):
    # x_ref:     (M, 3K)  im2col'd input, dy taps concatenated on K, M = N*H
    # w_ref:     (3K, L)  banded conv weights (dy and dx folded in), L = W*Cout
    # gamma_ref: (1, C)   BN scale, per channel
    # beta_ref:  (1, C)   BN shift, per channel
    # gmat_ref:  (L, C)   one-hot column -> channel fold matrix
    # gt_ref:    (C, L)   one-hot channel -> column broadcast matrix
    # o_ref:     (M, L)   lane-dense output
    M, L = o_ref.shape
    Cout = gmat_ref.shape[1]
    Wpix = L // Cout

    # --- 3x3 conv: ONE lane-dense MXU matmul (all 9 taps folded into the
    #     banded weights -> internal K accumulation, no per-tap adds, no
    #     unaligned sublane slices).
    acc = jnp.dot(x_ref[...], w_ref[...], preferred_element_type=jnp.float32)

    # --- BatchNorm2d (train mode), one-pass biased batch statistics.
    #     Stack [sum(x); sum(x^2)] and fold columns -> channels in ONE matmul.
    col = jnp.concatenate(
        [jnp.sum(acc, axis=0, keepdims=True),
         jnp.sum(acc * acc, axis=0, keepdims=True)], axis=0)           # (2, L)
    ch = jnp.dot(col, gmat_ref[...],
                 preferred_element_type=jnp.float32)                   # (2, C)
    inv_n = 1.0 / (M * Wpix)                                           # 1/(N*H*W)
    mean_c = ch[0:1] * inv_n
    var_c = ch[1:2] * inv_n - mean_c * mean_c                          # E[x^2]-E[x]^2
    istd_c = lax.rsqrt(var_c + BN_EPS)
    scale_c = istd_c * gamma_ref[...]                                  # (1, C)
    shift_c = beta_ref[...] - mean_c * scale_c                         # (1, C)
    # Broadcast per-channel scale/shift back to the 128-lane view in ONE matmul.
    sl = jnp.dot(jnp.concatenate([scale_c, shift_c], axis=0), gt_ref[...],
                 preferred_element_type=jnp.float32)                   # (2, L)

    y = acc * sl[0:1] + sl[1:2]

    # --- LeakyReLU(0.2), unmasked lane-dense store.
    o_ref[...] = jnp.where(y >= 0, y, LEAKY_SLOPE * y).astype(o_ref.dtype)


def make_gconv_params(weight_hwio, bias, gamma, beta, image_width):
    """Build all call-invariant tensors ONCE (they depend only on the conv/BN
    parameters and the image width) -- hoisted out of the per-call path."""
    f32 = jnp.float32
    kh, kw, Cin, Cout = weight_hwio.shape
    assert (kh, kw) == (3, 3)
    W = image_width
    Wp = W + 2
    K = Wp * Cin          # banded K per dy tap
    L = W * Cout          # lane-dense output width

    # A per-channel conv bias before train-mode BatchNorm is exactly cancelled
    # by the batch-mean subtraction -> dropped from the kernel entirely.
    del bias

    w = weight_hwio.astype(f32)
    # Banded ("Toeplitz") weights: band_dy[(p)*Cin+ci, w*Cout+co]
    #   = weight[dy, p-w, ci, co] for 0 <= p-w <= 2, else 0.
    # The three dy bands are concatenated along K so the whole 3x3 conv is one
    # (M, 3K) @ (3K, L) matmul.
    wcols = jnp.arange(W)
    bands = []
    for dy in range(3):
        band = jnp.zeros((K, L), f32)
        for dx in range(3):
            sel = (jnp.arange(Wp)[:, None] == (wcols[None, :] + dx)).astype(f32)
            band = band + jnp.kron(sel, w[dy, dx])                     # (K, L)
        bands.append(band)
    wcat = jnp.concatenate(bands, axis=0)                              # (3K, L)

    # One-hot column <-> channel fold / broadcast matrices for BN stats.
    gmat = (jnp.arange(L)[:, None] % Cout ==
            jnp.arange(Cout)[None, :]).astype(f32)                     # (L, C)
    gt = gmat.T                                                        # (C, L)

    gamma_c = gamma.astype(f32).reshape(1, Cout)
    beta_c = beta.astype(f32).reshape(1, Cout)
    return wcat, gamma_c, beta_c, gmat, gt


@jax.jit
def my_gconv(x_nchw, wcat, gamma_c, beta_c, gmat, gt):
    """x_nchw: (N, Cin, H, W) float32. Returns (N, Cout, H, W) float32."""
    N, Cin, H, W = x_nchw.shape
    Cout = gmat.shape[1]
    Hp, Wp = H + 2, W + 2
    M = N * H             # matmul M dim
    K = Wp * Cin          # per-tap K
    K3 = 3 * K            # concatenated K
    L = W * Cout          # lane-dense output width (128 at the test shape)
    f32 = jnp.float32

    # ---- input prep (fused XLA): NCHW -> NHWC, replication pad, im2col along
    #      H with the 3 dy taps concatenated on the K axis.
    x_nhwc = jnp.transpose(x_nchw.astype(f32), (0, 2, 3, 1))           # (N,H,W,Ci)
    xp = jnp.pad(x_nhwc, ((0, 0), (1, 1), (1, 1), (0, 0)), mode="edge")
    xr = xp.reshape(N, Hp, K)                                           # (N,Hp,K)
    x3cat = jnp.concatenate([xr[:, dy:dy + H, :] for dy in range(3)],
                            axis=-1).reshape(M, K3)                     # (M,3K)

    flops = 2 * M * K3 * L + 2 * (2 * L * Cout) + 2 * (2 * Cout * L) + 6 * M * L
    bytes_accessed = 4 * (M * K3 + K3 * L + 2 * Cout + 2 * L * Cout + M * L)

    out2d = pl.pallas_call(
        gconv_kernel,
        out_shape=jax.ShapeDtypeStruct((M, L), f32),
        grid=(1,),
        in_specs=[
            pl.BlockSpec((M, K3), lambda i: (0, 0)),
            pl.BlockSpec((K3, L), lambda i: (0, 0)),
            pl.BlockSpec((1, Cout), lambda i: (0, 0)),
            pl.BlockSpec((1, Cout), lambda i: (0, 0)),
            pl.BlockSpec((L, Cout), lambda i: (0, 0)),
            pl.BlockSpec((Cout, L), lambda i: (0, 0)),
        ],
        out_specs=pl.BlockSpec((M, L), lambda i: (0, 0)),
        compiler_params=pltpu.CompilerParams(
            dimension_semantics=("arbitrary",)),
        cost_estimate=pl.CostEstimate(
            flops=flops, transcendentals=Cout, bytes_accessed=bytes_accessed),
    )(x3cat, wcat, gamma_c, beta_c, gmat, gt)

    # (N*H, W*Cout) -> (N, H, W, Cout) -> NCHW.  (If the downstream consumer
    # can take NHWC, return the reshape directly and drop this transpose.)
    return out2d.reshape(N, H, W, Cout).transpose(0, 3, 1, 2)


def reference(x_nchw, weight_hwio, bias, gamma, beta):
    """Pure-JAX reference (same semantics as the PyTorch module in train mode,
    including the conv bias -- which BN's mean subtraction cancels)."""
    xp = jnp.pad(x_nchw, ((0, 0), (0, 0), (1, 1), (1, 1)), mode="edge")
    w_oihw = jnp.transpose(weight_hwio, (3, 2, 0, 1))
    y = lax.conv_general_dilated(
        xp, w_oihw, window_strides=(1, 1), padding="VALID",
        dimension_numbers=("NCHW", "OIHW", "NCHW"),
        precision=lax.Precision.HIGHEST)
    y = y + bias.reshape(1, -1, 1, 1)
    mean = jnp.mean(y, axis=(0, 2, 3), keepdims=True)
    var = jnp.mean((y - mean) ** 2, axis=(0, 2, 3), keepdims=True)
    y = (y - mean) * lax.rsqrt(var + BN_EPS)
    y = y * gamma.reshape(1, -1, 1, 1) + beta.reshape(1, -1, 1, 1)
    return jnp.where(y >= 0, y, LEAKY_SLOPE * y)


if __name__ == "__main__":
    # Small shapes consistent with the module (in_channels == num_filter,
    # stride=1): N=2, Cin=Cout=8, H=W=16  ->  lane-dense W*Cout = 128.
    N, Cin, Cout, H, W = 2, 8, 8, 16, 16

    key = jax.random.PRNGKey(0)
    kx, kw, kb = jax.random.split(key, 3)

    x = jax.random.normal(kx, (N, Cin, H, W), dtype=jnp.float32)

    # Deterministic parameter init (Kaiming-uniform-ish for conv; PyTorch
    # defaults gamma=1 / beta=0 for BatchNorm2d).
    fan_in = Cin * 3 * 3
    wbound = (6.0 / fan_in) ** 0.5
    weight_hwio = jax.random.uniform(
        kw, (3, 3, Cin, Cout), minval=-wbound, maxval=wbound, dtype=jnp.float32)
    bbound = 1.0 / (fan_in ** 0.5)
    bias = jax.random.uniform(kb, (Cout,), minval=-bbound, maxval=bbound,
                              dtype=jnp.float32)
    gamma = jnp.ones((Cout,), jnp.float32)
    beta = jnp.zeros((Cout,), jnp.float32)

    # Call-invariant tensors built ONCE (hoisted out of the forward path).
    params = make_gconv_params(weight_hwio, bias, gamma, beta, image_width=W)
    params = jax.block_until_ready(params)

    out = my_gconv(x, *params)
    out = jax.block_until_ready(out)

    ref = reference(x, weight_hwio, bias, gamma, beta)
    assert out.shape == (N, Cout, H, W)
    assert jnp.allclose(out, ref, atol=1e-4, rtol=1e-4), "mismatch vs reference"

    print("KERNEL_OK")
</pallas_src>

<mosaic_0001>
module attributes {stable_mosaic.version = 11 : i64} {
  func.func @gconv_kernel(%arg0: i32, %arg1: memref<32x432xf32, #tpu.memory_space<vmem>>, %arg2: memref<432x128xf32, #tpu.memory_space<vmem>>, %arg3: memref<1x8xf32, #tpu.memory_space<vmem>>, %arg4: memref<1x8xf32, #tpu.memory_space<vmem>>, %arg5: memref<128x8xf32, #tpu.memory_space<vmem>>, %arg6: memref<8x128xf32, #tpu.memory_space<vmem>>, %arg7: memref<32x128xf32, #tpu.memory_space<vmem>>) attributes {dimension_semantics = [#tpu.dimension_semantics<arbitrary>], iteration_bounds = array<i64: 1>, scalar_prefetch = 0 : i64, scratch_operands = 0 : i64, tpu.core_type = #tpu.core_type<tc>, window_params = [{pipeline_mode = #tpu.pipeline_mode<synchronous>, transform_indices = @transform_0, window_bounds = array<i64: 32, 432>}, {pipeline_mode = #tpu.pipeline_mode<synchronous>, transform_indices = @transform_1, window_bounds = array<i64: 432, 128>}, {pipeline_mode = #tpu.pipeline_mode<synchronous>, transform_indices = @transform_2, window_bounds = array<i64: 1, 8>}, {pipeline_mode = #tpu.pipeline_mode<synchronous>, transform_indices = @transform_3, window_bounds = array<i64: 1, 8>}, {pipeline_mode = #tpu.pipeline_mode<synchronous>, transform_indices = @transform_4, window_bounds = array<i64: 128, 8>}, {pipeline_mode = #tpu.pipeline_mode<synchronous>, transform_indices = @transform_5, window_bounds = array<i64: 8, 128>}, {pipeline_mode = #tpu.pipeline_mode<synchronous>, transform_indices = @transform_6, window_bounds = array<i64: 32, 128>}]} {
    %c0 = arith.constant 0 : index
    %c0_0 = arith.constant 0 : index
    %0 = vector.load %arg1[%c0, %c0_0] : memref<32x432xf32, #tpu.memory_space<vmem>>, vector<32x432xf32>
    %c0_1 = arith.constant 0 : index
    %c0_2 = arith.constant 0 : index
    %1 = vector.load %arg2[%c0_1, %c0_2] : memref<432x128xf32, #tpu.memory_space<vmem>>, vector<432x128xf32>
    %cst = arith.constant dense<0.000000e+00> : vector<32x128xf32>
    %2 = tpu.matmul %0, %1, %cst {dimension_numbers = #tpu.dot_dimension_numbers<[1], [0], [0], [1], [0, 0, 1, 1], [], []>} : vector<32x432xf32>, vector<432x128xf32>, vector<32x128xf32> -> vector<32x128xf32>
    %cst_3 = arith.constant dense<0.000000e+00> : vector<128xf32>
    %3 = vector.multi_reduction <add>, %2, %cst_3 [0] : vector<32x128xf32> to vector<128xf32>
    %4 = vector.shape_cast %3 : vector<128xf32> to vector<1x128xf32>
    %5 = arith.mulf %2, %2 : vector<32x128xf32>
    %cst_4 = arith.constant dense<0.000000e+00> : vector<128xf32>
    %6 = vector.multi_reduction <add>, %5, %cst_4 [0] : vector<32x128xf32> to vector<128xf32>
    %7 = vector.shape_cast %6 : vector<128xf32> to vector<1x128xf32>
    %8 = tpu.concatenate %4, %7 in 0 : vector<1x128xf32>, vector<1x128xf32> -> vector<2x128xf32>
    %c0_5 = arith.constant 0 : index
    %c0_6 = arith.constant 0 : index
    %9 = vector.load %arg5[%c0_5, %c0_6] : memref<128x8xf32, #tpu.memory_space<vmem>>, vector<128x8xf32>
    %cst_7 = arith.constant dense<0.000000e+00> : vector<2x8xf32>
    %10 = tpu.matmul %8, %9, %cst_7 {dimension_numbers = #tpu.dot_dimension_numbers<[1], [0], [0], [1], [0, 0, 1, 1], [], []>} : vector<2x128xf32>, vector<128x8xf32>, vector<2x8xf32> -> vector<2x8xf32>
    %11 = vector.extract_strided_slice %10 {offsets = [0, 0], sizes = [1, 8], strides = [1, 1]} : vector<2x8xf32> to vector<1x8xf32>
    %cst_8 = arith.constant 0.001953125 : f32
    %12 = vector.broadcast %cst_8 : f32 to vector<1x8xf32>
    %13 = arith.mulf %11, %12 : vector<1x8xf32>
    %14 = vector.extract_strided_slice %10 {offsets = [1, 0], sizes = [1, 8], strides = [1, 1]} : vector<2x8xf32> to vector<1x8xf32>
    %cst_9 = arith.constant 0.001953125 : f32
    %15 = vector.broadcast %cst_9 : f32 to vector<1x8xf32>
    %16 = arith.mulf %14, %15 : vector<1x8xf32>
    %17 = arith.mulf %13, %13 : vector<1x8xf32>
    %18 = arith.subf %16, %17 : vector<1x8xf32>
    %cst_10 = arith.constant 9.99999974E-6 : f32
    %19 = vector.broadcast %cst_10 : f32 to vector<1x8xf32>
    %20 = arith.addf %18, %19 : vector<1x8xf32>
    %21 = math.rsqrt %20 : vector<1x8xf32>
    %c0_11 = arith.constant 0 : index
    %c0_12 = arith.constant 0 : index
    %22 = vector.load %arg3[%c0_11, %c0_12] : memref<1x8xf32, #tpu.memory_space<vmem>>, vector<1x8xf32>
    %23 = arith.mulf %21, %22 : vector<1x8xf32>
    %c0_13 = arith.constant 0 : index
    %c0_14 = arith.constant 0 : index
    %24 = vector.load %arg4[%c0_13, %c0_14] : memref<1x8xf32, #tpu.memory_space<vmem>>, vector<1x8xf32>
    %25 = arith.mulf %13, %23 : vector<1x8xf32>
    %26 = arith.subf %24, %25 : vector<1x8xf32>
    %27 = tpu.concatenate %23, %26 in 0 : vector<1x8xf32>, vector<1x8xf32> -> vector<2x8xf32>
    %c0_15 = arith.constant 0 : index
    %c0_16 = arith.constant 0 : index
    %28 = vector.load %arg6[%c0_15, %c0_16] : memref<8x128xf32, #tpu.memory_space<vmem>>, vector<8x128xf32>
    %cst_17 = arith.constant dense<0.000000e+00> : vector<2x128xf32>
    %29 = tpu.matmul %27, %28, %cst_17 {dimension_numbers = #tpu.dot_dimension_numbers<[1], [0], [0], [1], [0, 0, 1, 1], [], []>} : vector<2x8xf32>, vector<8x128xf32>, vector<2x128xf32> -> vector<2x128xf32>
    %30 = vector.extract_strided_slice %29 {offsets = [0, 0], sizes = [1, 128], strides = [1, 1]} : vector<2x128xf32> to vector<1x128xf32>
    %31 = vector.broadcast %30 : vector<1x128xf32> to vector<32x128xf32>
    %32 = arith.mulf %2, %31 : vector<32x128xf32>
    %33 = vector.extract_strided_slice %29 {offsets = [1, 0], sizes = [1, 128], strides = [1, 1]} : vector<2x128xf32> to vector<1x128xf32>
    %34 = vector.broadcast %33 : vector<1x128xf32> to vector<32x128xf32>
    %35 = arith.addf %32, %34 : vector<32x128xf32>
    %cst_18 = arith.constant 0.000000e+00 : f32
    %36 = vector.broadcast %cst_18 : f32 to vector<32x128xf32>
    %37 = arith.cmpf oge, %35, %36 : vector<32x128xf32>
    %cst_19 = arith.constant 2.000000e-01 : f32
    %38 = vector.broadcast %cst_19 : f32 to vector<32x128xf32>
    %39 = arith.mulf %38, %35 : vector<32x128xf32>
    %40 = arith.select %37, %35, %39 : vector<32x128xi1>, vector<32x128xf32>
    %c0_20 = arith.constant 0 : index
    %c0_21 = arith.constant 0 : index
    %41 = vector.load %arg7[%c0_20, %c0_21] : memref<32x128xf32, #tpu.memory_space<vmem>>, vector<32x128xf32>
    tpu.vector_store %arg7[%c0_20, %c0_21], %40 {strides = array<i32>} : memref<32x128xf32, #tpu.memory_space<vmem>>, vector<32x128xf32>,
    return
  }
  func.func @transform_0(%arg0: i32) -> (i32, i32) {
    %c0_i32 = arith.constant 0 : i32
    %c0_i32_0 = arith.constant 0 : i32
    %c0_i32_1 = arith.constant 0 : i32
    return %c0_i32, %c0_i32_0 : i32, i32
  }
  func.func @transform_1(%arg0: i32) -> (i32, i32) {
    %c0_i32 = arith.constant 0 : i32
    %c0_i32_0 = arith.constant 0 : i32
    %c0_i32_1 = arith.constant 0 : i32
    return %c0_i32, %c0_i32_0 : i32, i32
  }
  func.func @transform_2(%arg0: i32) -> (i32, i32) {
    %c0_i32 = arith.constant 0 : i32
    %c0_i32_0 = arith.constant 0 : i32
    %c0_i32_1 = arith.constant 0 : i32
    return %c0_i32, %c0_i32_0 : i32, i32
  }
  func.func @transform_3(%arg0: i32) -> (i32, i32) {
    %c0_i32 = arith.constant 0 : i32
    %c0_i32_0 = arith.constant 0 : i32
    %c0_i32_1 = arith.constant 0 : i32
    return %c0_i32, %c0_i32_0 : i32, i32
  }
  func.func @transform_4(%arg0: i32) -> (i32, i32) {
    %c0_i32 = arith.constant 0 : i32
    %c0_i32_0 = arith.constant 0 : i32
    %c0_i32_1 = arith.constant 0 : i32
    return %c0_i32, %c0_i32_0 : i32, i32
  }
  func.func @transform_5(%arg0: i32) -> (i32, i32) {
    %c0_i32 = arith.constant 0 : i32
    %c0_i32_0 = arith.constant 0 : i32
    %c0_i32_1 = arith.constant 0 : i32
    return %c0_i32, %c0_i32_0 : i32, i32
  }
  func.func @transform_6(%arg0: i32) -> (i32, i32) {
    %c0_i32 = arith.constant 0 : i32
    %c0_i32_0 = arith.constant 0 : i32
    %c0_i32_1 = arith.constant 0 : i32
    return %c0_i32, %c0_i32_0 : i32, i32
  }
}

</mosaic_0001>

<llo_original>
// kernel: my_gconv.1
$region0: #{my_gconv.1}
  #allocation0 [shape = 'u32[]', space=smem, size = 0x4, offset = 0x4, fixed_abs, tag = 'smem constant byte address 0x4 - core index']
  #allocation1 [shape = 'u32[144,128]{1,0:T(1,128)}', space=vmem, size = 0x12000, scoped, tag = 'internal scratch']
  %s0 = inlined_call_operand.vmem [shape: f32[32,432], index: 0, kind: input, shape index: {}]
  %s1 = inlined_call_operand.vmem [shape: f32[432,128], index: 1, kind: input, shape index: {}]
  %s2 = inlined_call_operand.vmem [shape: f32[1,8], index: 2, kind: input, shape index: {}]
  %s3 = inlined_call_operand.vmem [shape: f32[1,8], index: 3, kind: input, shape index: {}]
  %s4 = inlined_call_operand.vmem [shape: f32[128,8], index: 4, kind: input, shape index: {}]
  %s5 = inlined_call_operand.vmem [shape: f32[8,128], index: 5, kind: input, shape index: {}]
  %s6 = inlined_call_operand.vmem [shape: f32[32,128], index: 6, kind: output, shape index: {}]
  %s7 = sld [smem:[#allocation0]]
  $region34: #{my_gconv.1} parent=0
    _
  %s9 = ssub.s32 1, %s7
  %s10 = scalar_select 0, %s9, %s7
  // Predicated region
  $region2: #{my_gconv.1} parent=0 // pred_check
    _
  $region3: #{my_gconv.1} parent=0 // pred_check_branch
    %12 = sbr.rel (0) target = $region5
  $region4: #{my_gconv.1} parent=0 // pred_region
    _
  $region5: #{my_gconv.1} parent=0 // pred_fallthru
    _
  // Predicated region
  $region6: #{my_gconv.1} parent=0 // pred_check
    _
  $region7: #{my_gconv.1} parent=0 // pred_check_branch
    %14 = sbr.rel (0) target = $region9
  $region8: #{my_gconv.1} parent=0 // pred_region
    _
  $region9: #{my_gconv.1} parent=0 // pred_fallthru
    _
  // Predicated region
  $region10: #{my_gconv.1} parent=0 // pred_check
    _
  $region11: #{my_gconv.1} parent=0 // pred_check_branch
    %16 = sbr.rel (0) target = $region13
  $region12: #{my_gconv.1} parent=0 // pred_region
    _
  $region13: #{my_gconv.1} parent=0 // pred_fallthru
    _
  // Predicated region
  $region14: #{my_gconv.1} parent=0 // pred_check
    _
  $region15: #{my_gconv.1} parent=0 // pred_check_branch
    %18 = sbr.rel (0) target = $region17
  $region16: #{my_gconv.1} parent=0 // pred_region
    _
  $region17: #{my_gconv.1} parent=0 // pred_fallthru
    _
  // Predicated region
  $region18: #{my_gconv.1} parent=0 // pred_check
    _
  $region19: #{my_gconv.1} parent=0 // pred_check_branch
    %20 = sbr.rel (0) target = $region21
  $region20: #{my_gconv.1} parent=0 // pred_region
    _
  $region21: #{my_gconv.1} parent=0 // pred_fallthru
    _
  // Predicated region
  $region22: #{my_gconv.1} parent=0 // pred_check
    _
  $region23: #{my_gconv.1} parent=0 // pred_check_branch
    %22 = sbr.rel (0) target = $region25
  $region24: #{my_gconv.1} parent=0 // pred_region
    _
  $region25: #{my_gconv.1} parent=0 // pred_fallthru
    _
  %v23 = vld [vmem:[%s0] sm:$0xff]
  %v24 = vld [vmem:[%s0 + $0x8] sm:$0xff]
  %v25 = vld [vmem:[%s0 + $0x10] sm:$0xff]
  %v26 = vld [vmem:[%s0 + $0x18] sm:$0xff]
  %v27 = vld [vmem:[%s0 + $0x20] sm:$0xff]
  %v28 = vld [vmem:[%s0 + $0x28] sm:$0xff]
  %v29 = vld [vmem:[%s0 + $0x30] sm:$0xff]
  %v30 = vld [vmem:[%s0 + $0x38] sm:$0xff]
  %v31 = vld [vmem:[%s0 + $0x40] sm:$0xff]
  %v32 = vld [vmem:[%s0 + $0x48] sm:$0xff]
  %v33 = vld [vmem:[%s0 + $0x50] sm:$0xff]
  %v34 = vld [vmem:[%s0 + $0x58] sm:$0xff]
  %v35 = vld [vmem:[%s0 + $0x60] sm:$0xff]
  %v36 = vld [vmem:[%s0 + $0x68] sm:$0xff]
  %v37 = vld [vmem:[%s0 + $0x70] sm:$0xff]
  %v38 = vld [vmem:[%s0 + $0x78] sm:$0xff]
  %v39 = vld [vmem:[%s1] sm:$0xff]
  %v40 = vld [vmem:[%s1 + $0x8] sm:$0xff]
  %v41 = vld [vmem:[%s1 + $0x10] sm:$0xff]
  %v42 = vld [vmem:[%s1 + $0x18] sm:$0xff]
  %v43 = vld [vmem:[%s1 + $0x20] sm:$0xff]
  %v44 = vld [vmem:[%s1 + $0x28] sm:$0xff]
  %v45 = vld [vmem:[%s1 + $0x30] sm:$0xff]
  %v46 = vld [vmem:[%s1 + $0x38] sm:$0xff]
  %v47 = vld [vmem:[%s1 + $0x40] sm:$0xff]
  %v48 = vld [vmem:[%s1 + $0x48] sm:$0xff]
  %v49 = vld [vmem:[%s1 + $0x50] sm:$0xff]
  %v50 = vld [vmem:[%s1 + $0x58] sm:$0xff]
  %v51 = vld [vmem:[%s1 + $0x60] sm:$0xff]
  %v52 = vld [vmem:[%s1 + $0x68] sm:$0xff]
  %v53 = vld [vmem:[%s1 + $0x70] sm:$0xff]
  %v54 = vld [vmem:[%s1 + $0x78] sm:$0xff]
  %v55 = vld [vmem:[%s1 + $0x80] sm:$0xff]
  %v56 = vld [vmem:[%s1 + $0x88] sm:$0xff]
  %v57 = vld [vmem:[%s1 + $0x90] sm:$0xff]
  %v58 = vld [vmem:[%s1 + $0x98] sm:$0xff]
  %v59 = vld [vmem:[%s1 + $0xa0] sm:$0xff]
  %v60 = vld [vmem:[%s1 + $0xa8] sm:$0xff]
  %v61 = vld [vmem:[%s1 + $0xb0] sm:$0xff]
  %v62 = vld [vmem:[%s1 + $0xb8] sm:$0xff]
  %v63 = vld [vmem:[%s1 + $0xc0] sm:$0xff]
  %v64 = vld [vmem:[%s1 + $0xc8] sm:$0xff]
  %v65 = vld [vmem:[%s1 + $0xd0] sm:$0xff]
  %v66 = vld [vmem:[%s1 + $0xd8] sm:$0xff]
  %v67 = vld [vmem:[%s1 + $0xe0] sm:$0xff]
  %v68 = vld [vmem:[%s1 + $0xe8] sm:$0xff]
  %v69 = vld [vmem:[%s1 + $0xf0] sm:$0xff]
  %v70 = vld [vmem:[%s1 + $0xf8] sm:$0xff]
  %v71 = vld [vmem:[%s1 + $0x100] sm:$0xff]
  %v72 = vld [vmem:[%s1 + $0x108] sm:$0xff]
  %v73 = vld [vmem:[%s1 + $0x110] sm:$0xff]
  %v74 = vld [vmem:[%s1 + $0x118] sm:$0xff]
  %v75 = vld [vmem:[%s1 + $0x120] sm:$0xff]
  %v76 = vld [vmem:[%s1 + $0x128] sm:$0xff]
  %v77 = vld [vmem:[%s1 + $0x130] sm:$0xff]
  %v78 = vld [vmem:[%s1 + $0x138] sm:$0xff]
  %v79 = vld [vmem:[%s1 + $0x140] sm:$0xff]
  %v80 = vld [vmem:[%s1 + $0x148] sm:$0xff]
  %v81 = vld [vmem:[%s1 + $0x150] sm:$0xff]
  %v82 = vld [vmem:[%s1 + $0x158] sm:$0xff]
  %v83 = vld [vmem:[%s1 + $0x160] sm:$0xff]
  %v84 = vld [vmem:[%s1 + $0x168] sm:$0xff]
  %v85 = vld [vmem:[%s1 + $0x170] sm:$0xff]
  %v86 = vld [vmem:[%s1 + $0x178] sm:$0xff]
  %v87 = vld [vmem:[%s1 + $0x180] sm:$0xff]
  %v88 = vld [vmem:[%s1 + $0x188] sm:$0xff]
  %v89 = vld [vmem:[%s1 + $0x190] sm:$0xff]
  %v90 = vld [vmem:[%s1 + $0x198] sm:$0xff]
  %v91 = vld [vmem:[%s1 + $0x1a0] sm:$0xff]
  %v92 = vld [vmem:[%s1 + $0x1a8] sm:$0xff]
  %vm93 = vcmask 392192
  %v95 = vsel %vm93, %v26, 0
  %v98 = vsel %vm93, %v30, 0
  %v101 = vsel %vm93, %v34, 0
  %v104 = vsel %vm93, %v38, 0
  %106 = vmatprep.subr.mxu0 0.0
  %107 = vmatpush1.msra.mxu0 %v39
  %108 = vmatprep.subr.mxu0 0.0
  %109 = vmatpush1.msra.mxu0 %v40
  %110 = vmatprep.subr.mxu0 0.0
  %111 = vmatpush1.msra.mxu0 %v41
  %112 = vmatprep.subr.mxu0 0.0
  %113 = vmatpush1.msra.mxu0 %v42
  %114 = vmatprep.subr.mxu0 0.0
  %115 = vmatpush1.msra.mxu0 %v43
  %116 = vmatprep.subr.mxu0 0.0
  %117 = vmatpush1.msra.mxu0 %v44
  %118 = vmatprep.subr.mxu0 0.0
  %119 = vmatpush1.msra.mxu0 %v45
  %120 = vmatprep.subr.mxu0 0.0
  %121 = vmatpush1.msra.mxu0 %v46
  %122 = vmatprep.subr.mxu0 0.0
  %123 = vmatpush1.msra.mxu0 %v47
  %124 = vmatprep.subr.mxu0 0.0
  %125 = vmatpush1.msra.mxu0 %v48
  %126 = vmatprep.subr.mxu0 0.0
  %127 = vmatpush1.msra.mxu0 %v49
  %128 = vmatprep.subr.mxu0 0.0
  %129 = vmatpush1.msra.mxu0 %v50
  %130 = vmatprep.subr.mxu0 0.0
  %131 = vmatpush1.msra.mxu0 %v51
  %132 = vmatprep.subr.mxu0 0.0
  %133 = vmatpush1.msra.mxu0 %v52
  %134 = vmatprep.subr.mxu0 0.0
  %135 = vmatpush1.msra.mxu0 %v53
  %136 = vmatprep.subr.mxu0 0.0
  %137 = vmatpush1.msra.mxu0 %v54
  %138 = vmatprep.subr.mxu0 0.0
  %139 = vmatpush1.msra.mxu0 %v55
  %140 = vmatprep.subr.mxu0 0.0
  %141 = vmatpush1.msra.mxu0 %v56
  %142 = vmatprep.subr.mxu0 0.0
  %143 = vmatpush1.msra.mxu0 %v57
  %144 = vmatprep.subr.mxu0 0.0
  %145 = vmatpush1.msra.mxu0 %v58
  %146 = vmatprep.subr.mxu0 0.0
  %147 = vmatpush1.msra.mxu0 %v59
  %148 = vmatprep.subr.mxu0 0.0
  %149 = vmatpush1.msra.mxu0 %v60
  %150 = vmatprep.subr.mxu0 0.0
  %151 = vmatpush1.msra.mxu0 %v61
  %152 = vmatprep.subr.mxu0 0.0
  %153 = vmatpush1.msra.mxu0 %v62
  %154 = vmatprep.subr.mxu0 0.0
  %155 = vmatpush1.msra.mxu0 %v63
  %156 = vmatprep.subr.mxu0 0.0
  %157 = vmatpush1.msra.mxu0 %v64
  %158 = vmatprep.subr.mxu0 0.0
  %159 = vmatpush1.msra.mxu0 %v65
  %160 = vmatprep.subr.mxu0 0.0
  %161 = vmatpush1.msra.mxu0 %v66
  %162 = vmatprep.subr.mxu0 0.0
  %163 = vmatpush1.msra.mxu0 %v67
  %164 = vmatprep.subr.mxu0 0.0
  %165 = vmatpush1.msra.mxu0 %v68
  %166 = vmatprep.subr.mxu0 0.0
  %167 = vmatpush1.msra.mxu0 %v69
  %168 = vmatprep.subr.mxu0 0.0
  %169 = vmatpush1.msra.mxu0 %v70
  %170 = vmatprep.mubr.f32.mxu0 %v24
  %171 = vmatmul.mubr.f32.gmra.mrb[0].mxu0 %v23
  %v172 = vpop.f32.mrb[0].mxu0
  %v173 = vadd.f32 0.0, %v172
  %v174 = vpop.f32.mrb[0].mxu0
  %175 = vmatprep.mubr.f32.mxu0 %v28
  %176 = vmatmul.mubr.f32.gmra.mrb[0].mxu0 %v27
  %v177 = vpop.f32.mrb[0].mxu0
  %v178 = vadd.f32 0.0, %v177
  %v179 = vpop.f32.mrb[0].mxu0
  %180 = vmatprep.mubr.f32.mxu0 %v32
  %181 = vmatmul.mubr.f32.gmra.mrb[0].mxu0 %v31
  %v182 = vpop.f32.mrb[0].mxu0
  %v183 = vadd.f32 0.0, %v182
  %v184 = vpop.f32.mrb[0].mxu0
  %185 = vmatprep.mubr.f32.mxu0 %v36
  %186 = vmatmul.mubr.f32.gmra.mrb[0].mxu0 %v35
  %v187 = vpop.f32.mrb[0].mxu0
  %v188 = vadd.f32 0.0, %v187
  %v189 = vpop.f32.mrb[0].mxu0
  %190 = vdwg.mxu0
  %191 = vmatprep.subr.mxu0 0.0
  %192 = vmatpush1.msra.mxu0 %v71
  %193 = vmatprep.subr.mxu0 0.0
  %194 = vmatpush1.msra.mxu0 %v72
  %195 = vmatprep.subr.mxu0 0.0
  %196 = vmatpush1.msra.mxu0 %v73
  %197 = vmatprep.subr.mxu0 0.0
  %198 = vmatpush1.msra.mxu0 %v74
  %199 = vmatprep.subr.mxu0 0.0
  %200 = vmatpush1.msra.mxu0 %v75
  %201 = vmatprep.subr.mxu0 0.0
  %202 = vmatpush1.msra.mxu0 %v76
  %203 = vmatprep.subr.mxu0 0.0
  %204 = vmatpush1.msra.mxu0 %v77
  %205 = vmatprep.subr.mxu0 0.0
  %206 = vmatpush1.msra.mxu0 %v78
  %207 = vmatprep.subr.mxu0 0.0
  %208 = vmatpush1.msra.mxu0 %v79
  %209 = vmatprep.subr.mxu0 0.0
  %210 = vmatpush1.msra.mxu0 %v80
  %211 = vmatprep.subr.mxu0 0.0
  %212 = vmatpush1.msra.mxu0 %v81
  %213 = vmatprep.subr.mxu0 0.0
  %214 = vmatpush1.msra.mxu0 %v82
  %215 = vmatprep.subr.mxu0 0.0
  %216 = vmatpush1.msra.mxu0 %v83
  %217 = vmatprep.subr.mxu0 0.0
  %218 = vmatpush1.msra.mxu0 %v84
  %219 = vmatprep.subr.mxu0 0.0
  %220 = vmatpush1.msra.mxu0 %v85
  %221 = vmatprep.subr.mxu0 0.0
  %222 = vmatpush1.msra.mxu0 %v86
  %223 = vmatprep.subr.mxu0 0.0
  %224 = vmatpush1.msra.mxu0 %v87
  %225 = vmatprep.subr.mxu0 0.0
  %226 = vmatpush1.msra.mxu0 %v88
  %227 = vmatprep.subr.mxu0 0.0
  %228 = vmatpush1.msra.mxu0 %v89
  %229 = vmatprep.subr.mxu0 0.0
  %230 = vmatpush1.msra.mxu0 %v90
  %231 = vmatprep.subr.mxu0 0.0
  %232 = vmatpush1.msra.mxu0 %v91
  %233 = vmatprep.subr.mxu0 0.0
  %234 = vmatpush1.msra.mxu0 %v92
  %235 = vmatprep.subr.mxu0 0.0
  %236 = vmatpush1.msra.mxu0 0.0
  %237 = vmatprep.subr.mxu0 0.0
  %238 = vmatpush1.msra.mxu0 0.0
  %239 = vmatprep.subr.mxu0 0.0
  %240 = vmatpush1.msra.mxu0 0.0
  %241 = vmatprep.subr.mxu0 0.0
  %242 = vmatpush1.msra.mxu0 0.0
  %243 = vmatprep.subr.mxu0 0.0
  %244 = vmatpush1.msra.mxu0 0.0
  %245 = vmatprep.subr.mxu0 0.0
  %246 = vmatpush1.msra.mxu0 0.0
  %247 = vmatprep.subr.mxu0 0.0
  %248 = vmatpush1.msra.mxu0 0.0
  %249 = vmatprep.subr.mxu0 0.0
  %250 = vmatpush1.msra.mxu0 0.0
  %251 = vmatprep.subr.mxu0 0.0
  %252 = vmatpush1.msra.mxu0 0.0
  %253 = vmatprep.subr.mxu0 0.0
  %254 = vmatpush1.msra.mxu0 0.0
  %255 = vmatprep.mubr.f32.mxu0 %v95
  %256 = vmatmul.mubr.f32.gmra.mrb[0].mxu0 %v25
  %v257 = vpop.f32.mrb[0].mxu0
  %v258 = vadd.f32 %v173, %v257
  %v259 = vpop.f32.mrb[0].mxu0
  %260 = vmatprep.mubr.f32.mxu0 %v98
  %261 = vmatmul.mubr.f32.gmra.mrb[0].mxu0 %v29
  %v262 = vpop.f32.mrb[0].mxu0
  %v263 = vadd.f32 %v178, %v262
  %v264 = vpop.f32.mrb[0].mxu0
  %265 = vmatprep.mubr.f32.mxu0 %v101
  %266 = vmatmul.mubr.f32.gmra.mrb[0].mxu0 %v33
  %v267 = vpop.f32.mrb[0].mxu0
  %v268 = vadd.f32 %v183, %v267
  %v269 = vpop.f32.mrb[0].mxu0
  %270 = vmatprep.mubr.f32.mxu0 %v104
  %271 = vmatmul.mubr.f32.gmra.mrb[0].mxu0 %v37
  %v272 = vpop.f32.mrb[0].mxu0
  %v273 = vadd.f32 %v188, %v272
  %v274 = vpop.f32.mrb[0].mxu0
  %275 = vdwg.mxu0
  %v276 = vadd.f32 %v258, %v263
  %v277 = vadd.f32 %v276, %v268
  %v278 = vadd.f32 %v277, %v273
  %v279 = vrot.slane %v278, 4
  %v280 = vadd.f32 %v278, %v279
  %v281 = vrot.slane %v280, 2
  %v282 = vadd.f32 %v280, %v281
  %v283 = vrot.slane %v282, 1
  %v284 = vadd.f32 %v282, %v283
  %v285 = vmul.f32 %v258, %v258
  %v286 = vmul.f32 %v263, %v263
  %v287 = vmul.f32 %v268, %v268
  %v288 = vmul.f32 %v273, %v273
  %v289 = vadd.f32 %v285, %v286
  %v290 = vadd.f32 %v289, %v287
  %v291 = vadd.f32 %v290, %v288
  %v292 = vrot.slane %v291, 4
  %v293 = vadd.f32 %v291, %v292
  %v294 = vrot.slane %v293, 2
  %v295 = vadd.f32 %v293, %v294
  %v296 = vrot.slane %v295, 1
  %v297 = vadd.f32 %v295, %v296
  %vm298 = vcmask 1040384
  %v299 = vsel %vm298, %v284, %v297
  %v300 = vld [vmem:[%s4] sm:$0xff]
  %v301 = vld [vmem:[%s4 + $0x8] sm:$0xff]
  %v302 = vld [vmem:[%s4 + $0x10] sm:$0xff]
  %v303 = vld [vmem:[%s4 + $0x18] sm:$0xff]
  %v304 = vld [vmem:[%s4 + $0x20] sm:$0xff]
  %v305 = vld [vmem:[%s4 + $0x28] sm:$0xff]
  %v306 = vld [vmem:[%s4 + $0x30] sm:$0xff]
  %v307 = vld [vmem:[%s4 + $0x38] sm:$0xff]
  %v308 = vld [vmem:[%s4 + $0x40] sm:$0xff]
  %v309 = vld [vmem:[%s4 + $0x48] sm:$0xff]
  %v310 = vld [vmem:[%s4 + $0x50] sm:$0xff]
  %v311 = vld [vmem:[%s4 + $0x58] sm:$0xff]
  %v312 = vld [vmem:[%s4 + $0x60] sm:$0xff]
  %v313 = vld [vmem:[%s4 + $0x68] sm:$0xff]
  %v314 = vld [vmem:[%s4 + $0x70] sm:$0xff]
  %v315 = vld [vmem:[%s4 + $0x78] sm:$0xff]
  %316 = vmatprep.subr.mxu0 0.0
  %317 = vmatpush1.msra.mxu0 %v300
  %318 = vmatprep.subr.mxu0 0.0
  %319 = vmatpush1.msra.mxu0 %v301
  %320 = vmatprep.subr.mxu0 0.0
  %321 = vmatpush1.msra.mxu0 %v302
  %322 = vmatprep.subr.mxu0 0.0
  %323 = vmatpush1.msra.mxu0 %v303
  %324 = vmatprep.subr.mxu0 0.0
  %325 = vmatpush1.msra.mxu0 %v304
  %326 = vmatprep.subr.mxu0 0.0
  %327 = vmatpush1.msra.mxu0 %v305
  %328 = vmatprep.subr.mxu0 0.0
  %329 = vmatpush1.msra.mxu0 %v306
  %330 = vmatprep.subr.mxu0 0.0
  %331 = vmatpush1.msra.mxu0 %v307
  %332 = vmatprep.subr.mxu0 0.0
  %333 = vmatpush1.msra.mxu0 %v308
  %334 = vmatprep.subr.mxu0 0.0
  %335 = vmatpush1.msra.mxu0 %v309
  %336 = vmatprep.subr.mxu0 0.0
  %337 = vmatpush1.msra.mxu0 %v310
  %338 = vmatprep.subr.mxu0 0.0
  %339 = vmatpush1.msra.mxu0 %v311
  %340 = vmatprep.subr.mxu0 0.0
  %341 = vmatpush1.msra.mxu0 %v312
  %342 = vmatprep.subr.mxu0 0.0
  %343 = vmatpush1.msra.mxu0 %v313
  %344 = vmatprep.subr.mxu0 0.0
  %345 = vmatpush1.msra.mxu0 %v314
  %346 = vmatprep.subr.mxu0 0.0
  %347 = vmatpush1.msra.mxu0 %v315
  %348 = vmatprep.subr.mxu0 0.0
  %349 = vmatpush1.msra.mxu0 0.0
  %350 = vmatprep.subr.mxu0 0.0
  %351 = vmatpush1.msra.mxu0 0.0
  %352 = vmatprep.subr.mxu0 0.0
  %353 = vmatpush1.msra.mxu0 0.0
  %354 = vmatprep.subr.mxu0 0.0
  %355 = vmatpush1.msra.mxu0 0.0
  %356 = vmatprep.subr.mxu0 0.0
  %357 = vmatpush1.msra.mxu0 0.0
  %358 = vmatprep.subr.mxu0 0.0
  %359 = vmatpush1.msra.mxu0 0.0
  %360 = vmatprep.subr.mxu0 0.0
  %361 = vmatpush1.msra.mxu0 0.0
  %362 = vmatprep.subr.mxu0 0.0
  %363 = vmatpush1.msra.mxu0 0.0
  %364 = vmatprep.subr.mxu0 0.0
  %365 = vmatpush1.msra.mxu0 0.0
  %366 = vmatprep.subr.mxu0 0.0
  %367 = vmatpush1.msra.mxu0 0.0
  %368 = vmatprep.subr.mxu0 0.0
  %369 = vmatpush1.msra.mxu0 0.0
  %370 = vmatprep.subr.mxu0 0.0
  %371 = vmatpush1.msra.mxu0 0.0
  %372 = vmatprep.subr.mxu0 0.0
  %373 = vmatpush1.msra.mxu0 0.0
  %374 = vmatprep.subr.mxu0 0.0
  %375 = vmatpush1.msra.mxu0 0.0
  %376 = vmatprep.subr.mxu0 0.0
  %377 = vmatpush1.msra.mxu0 0.0
  %378 = vmatprep.subr.mxu0 0.0
  %379 = vmatpush1.msra.mxu0 0.0
  %380 = vmatprep.mubr.f32.mxu0 0.0
  %381 = vmatmul.mubr.f32.gmra.mrb[0].mxu0 %v299
  %v382 = vpop.f32.mrb[0].mxu0
  %v383 = vadd.f32 0.0, %v382
  %v384 = vpop.f32.mrb[0].mxu0
  %385 = vdwg.mxu0
  %v386 = vmul.f32 %v383, 0.001953125
  %v387 = vmul.f32 %v386, %v386
  %v389 = vrot.slane %v387, 7
  %v391 = vsub.f32 %v386, %v389
  %v392 = vadd.f32 %v391, 1e-05
  %v393 = vrsqrt.pop %v392
  %v394 = vld [vmem:[%s2] sm:$0x1]
  %v396 = vlaneseq
  %v397 = vshrl.u32 %v396, 7
  %v398 = vsub.s32 0, %v397
  %v399 = vrot.slane %v394, %v398
  %v401 = vmul.f32 %v393, %v399
  %v402 = vld [vmem:[%s3] sm:$0x1]
  %v404 = vrot.slane %v401, 1
  %v406 = vmul.f32 %v386, %v404
  %v407 = vsub.f32 %v402, %v406
  %v409 = vlaneseq
  %v410 = vshrl.u32 %v409, 7
  %v411 = vsub.s32 0, %v410
  %v412 = vrot.slane %v407, %v411
  %v414 = vsel %vm298, %v404, %v412
  %v415 = vld [vmem:[%s5] sm:$0xff]
  %vm416 = vcmask 64512
  %v418 = vsel %vm416, %v414, 0
  %420 = vmatprep.subr.mxu0 0.0
  %421 = vmatpush1.msra.mxu0 %v415
  %422 = vmatprep.subr.mxu0 0.0
  %423 = vmatpush1.msra.mxu0 0.0
  %424 = vmatprep.subr.mxu0 0.0
  %425 = vmatpush1.msra.mxu0 0.0
  %426 = vmatprep.subr.mxu0 0.0
  %427 = vmatpush1.msra.mxu0 0.0
  %428 = vmatprep.subr.mxu0 0.0
  %429 = vmatpush1.msra.mxu0 0.0
  %430 = vmatprep.subr.mxu0 0.0
  %431 = vmatpush1.msra.mxu0 0.0
  %432 = vmatprep.subr.mxu0 0.0
  %433 = vmatpush1.msra.mxu0 0.0
  %434 = vmatprep.subr.mxu0 0.0
  %435 = vmatpush1.msra.mxu0 0.0
  %436 = vmatprep.subr.mxu0 0.0
  %437 = vmatpush1.msra.mxu0 0.0
  %438 = vmatprep.subr.mxu0 0.0
  %439 = vmatpush1.msra.mxu0 0.0
  %440 = vmatprep.subr.mxu0 0.0
  %441 = vmatpush1.msra.mxu0 0.0
  %442 = vmatprep.subr.mxu0 0.0
  %443 = vmatpush1.msra.mxu0 0.0
  %444 = vmatprep.subr.mxu0 0.0
  %445 = vmatpush1.msra.mxu0 0.0
  %446 = vmatprep.subr.mxu0 0.0
  %447 = vmatpush1.msra.mxu0 0.0
  %448 = vmatprep.subr.mxu0 0.0
  %449 = vmatpush1.msra.mxu0 0.0
  %450 = vmatprep.subr.mxu0 0.0
  %451 = vmatpush1.msra.mxu0 0.0
  %452 = vmatprep.subr.mxu0 0.0
  %453 = vmatpush1.msra.mxu0 0.0
  %454 = vmatprep.subr.mxu0 0.0
  %455 = vmatpush1.msra.mxu0 0.0
  %456 = vmatprep.subr.mxu0 0.0
  %457 = vmatpush1.msra.mxu0 0.0
  %458 = vmatprep.subr.mxu0 0.0
  %459 = vmatpush1.msra.mxu0 0.0
  %460 = vmatprep.subr.mxu0 0.0
  %461 = vmatpush1.msra.mxu0 0.0
  %462 = vmatprep.subr.mxu0 0.0
  %463 = vmatpush1.msra.mxu0 0.0
  %464 = vmatprep.subr.mxu0 0.0
  %465 = vmatpush1.msra.mxu0 0.0
  %466 = vmatprep.subr.mxu0 0.0
  %467 = vmatpush1.msra.mxu0 0.0
  %468 = vmatprep.subr.mxu0 0.0
  %469 = vmatpush1.msra.mxu0 0.0
  %470 = vmatprep.subr.mxu0 0.0
  %471 = vmatpush1.msra.mxu0 0.0
  %472 = vmatprep.subr.mxu0 0.0
  %473 = vmatpush1.msra.mxu0 0.0
  %474 = vmatprep.subr.mxu0 0.0
  %475 = vmatpush1.msra.mxu0 0.0
  %476 = vmatprep.subr.mxu0 0.0
  %477 = vmatpush1.msra.mxu0 0.0
  %478 = vmatprep.subr.mxu0 0.0
  %479 = vmatpush1.msra.mxu0 0.0
  %480 = vmatprep.subr.mxu0 0.0
  %481 = vmatpush1.msra.mxu0 0.0
  %482 = vmatprep.subr.mxu0 0.0
  %483 = vmatpush1.msra.mxu0 0.0
  %484 = vmatprep.mubr.f32.mxu0 0.0
  %485 = vmatmul.mubr.f32.gmra.mrb[0].mxu0 %v418
  %v486 = vpop.f32.mrb[0].mxu0
  %v487 = vadd.f32 0.0, %v486
  %v488 = vpop.f32.mrb[0].mxu0
  %489 = vdwg.mxu0
  %v490 = vlaneseq
  %v491 = vshrl.u32 %v490, 7
  %v492 = vsub.s32 0, %v491
  %v493 = vrot.slane %v487, %v492
  %v494 = vmul.f32 %v258, %v493
  %v495 = vmul.f32 %v263, %v493
  %v496 = vmul.f32 %v268, %v493
  %v497 = vmul.f32 %v273, %v493
  %v498 = vlaneseq
  %v499 = vshrl.u32 %v498, 7
  %v500 = vsub.s32 1, %v499
  %v501 = vrot.slane %v487, %v500
  %v502 = vadd.f32 %v494, %v501
  %v503 = vadd.f32 %v495, %v501
  %v504 = vadd.f32 %v496, %v501
  %v505 = vadd.f32 %v497, %v501
  %vm506 = vcmp.ge.f32.partialorder %v502, 0.0
  %vm507 = vcmp.ge.f32.partialorder %v503, 0.0
  %vm508 = vcmp.ge.f32.partialorder %v504, 0.0
  %vm509 = vcmp.ge.f32.partialorder %v505, 0.0
  %v510 = vmul.f32 %v502, 0.2
  %v511 = vmul.f32 %v503, 0.2
  %v512 = vmul.f32 %v504, 0.2
  %v513 = vmul.f32 %v505, 0.2
  %v514 = vsel %vm506, %v502, %v510
  %v515 = vsel %vm507, %v503, %v511
  %v516 = vsel %vm508, %v504, %v512
  %v517 = vsel %vm509, %v505, %v513
  %518 = vst [vmem:[%s6] sm:$0xff] %v514
  %519 = vst [vmem:[%s6 + $0x8] sm:$0xff] %v515
  %520 = vst [vmem:[%s6 + $0x10] sm:$0xff] %v516
  %521 = vst [vmem:[%s6 + $0x18] sm:$0xff] %v517
  // Predicated region
  $region26: #{my_gconv.1} parent=0 // pred_check
    _
  $region27: #{my_gconv.1} parent=0 // pred_check_branch
    %523 = sbr.rel (0) target = $region29
  $region28: #{my_gconv.1} parent=0 // pred_region
    _
  $region29: #{my_gconv.1} parent=0 // pred_fallthru
    _
  // Predicated region
  $region30: #{my_gconv.1} parent=0 // pred_check
    _
  $region31: #{my_gconv.1} parent=0 // pred_check_branch
    %525 = sbr.rel (0) target = $region33
  $region32: #{my_gconv.1} parent=0 // pred_region
    _
  $region33: #{my_gconv.1} parent=0 // pred_fallthru
    _

</llo_original>
